<compile_context>
chip_gen: v6e
topology: v6e:2x2x1
jax: 0.10.0
libtpu: 0.0.40
codegen_flags: <defaults>
</compile_context>

<pallas_src>
import jax
import jax.numpy as jnp
from jax.experimental import pallas as pl
from jax.experimental.pallas import tpu as pltpu


def _round_up(v, m):
    return ((v + m - 1) // m) * m


def _cdiv(a, b):
    return -(-a // b)


def _vmem_capacity_bytes():
    """Best-effort VMEM capacity query; conservative (v7x, 64 MiB) fallback."""
    try:
        info = pltpu.get_tpu_info()
        for attr in ("vmem_capacity_bytes", "vmem_size_bytes", "vmem_bytes"):
            cap = getattr(info, attr, None)
            if cap:
                return int(cap)
    except Exception:
        pass
    return 64 * 1024 * 1024


def _const_model_kernel(x_ref, w1_ref, b1_ref, w2_ref, b2pos_ref, o_ref):
    # Hot path: two MXU matmuls (bf16 operands, f32 accumulation) + SiLU.
    # The kernel is ~5-10x HBM-write-bound, so all of this compute (including
    # the exact exp+divide sigmoid) hides completely under the output-store DMA.
    x = x_ref[...]                                                   # (tm, 8) bf16
    h = jnp.dot(x, w1_ref[...], preferred_element_type=jnp.float32) + b1_ref[...]
    h = h / (1.0 + jnp.exp(-h))                                      # SiLU (exact)
    y = jnp.dot(h.astype(w2_ref.dtype), w2_ref[...],
                preferred_element_type=jnp.float32) + b2pos_ref[0:1, :]
    y = y / (1.0 + jnp.exp(-y))                                      # SiLU (exact)
    o_ref[...] = (y + b2pos_ref[1:2, :]).astype(o_ref.dtype)         # + pos_enc


def const_model_forward(x, w1, b1, w2, b2, pos_enc, *, tm=2048,
                        compute_dtype=jnp.bfloat16, out_dtype=jnp.float32):
    """x: (B, S, 6) float32. Returns (B, S, embed) in `out_dtype` (default f32)."""
    B, S, K = x.shape
    H = w1.shape[1]          # 128
    E = w2.shape[1]          # embed_size

    M = B * S
    cd_isz = jnp.dtype(compute_dtype).itemsize
    out_isz = jnp.dtype(out_dtype).itemsize

    # --- host-side layout prep (cheap, fused by XLA) -----------------------------
    x2d = x.reshape(M, K)

    # Contraction dim 6 -> 8: zero rows appended to w1 keep the matmul exact.
    K_pad = _round_up(max(K, 8), 8)
    if K_pad != K:
        x2d = jnp.pad(x2d, ((0, 0), (0, K_pad - K)))
        w1 = jnp.pad(w1, ((0, K_pad - K), (0, 0)))

    # Lane-dense output: pad embed dim to a multiple of 128 (guard for E % 128 != 0;
    # no-op at E=512).  Padded columns are sliced off after the call.
    E_pad = _round_up(E, 128)
    b2_flat = b2.reshape(E)
    pos_flat = pos_enc.reshape(E)
    if E_pad != E:
        w2 = jnp.pad(w2, ((0, 0), (0, E_pad - E)))
        b2_flat = jnp.pad(b2_flat, (0, E_pad - E))
        pos_flat = jnp.pad(pos_flat, (0, E_pad - E))

    # --- tile selection ----------------------------------------------------------
    # VMEM budget: double-buffered output + input tiles dominate; resident weights
    # are small.  Derive the row-tile cap from the chip's capacity so large embed
    # sizes stay inside v7x's 64 MiB (and comfortably inside v5e/v6e's 128 MiB).
    vmem_cap = _vmem_capacity_bytes()
    budget = (vmem_cap * 3) // 4
    weights_bytes = 2 * (K_pad * H * cd_isz      # w1 (double-buffered, resident)
                         + H * 4                 # b1 (f32)
                         + H * E_pad * cd_isz    # w2
                         + 2 * E_pad * 4)        # [b2; pos_enc] (f32)
    slack = 4 << 20
    per_row = 2 * (E_pad * out_isz + K_pad * cd_isz)   # double-buffered out + in
    tm_cap = max(16, ((budget - weights_bytes - slack) // per_row) // 16 * 16)
    tm = max(16, (int(tm) // 16) * 16)
    tm = min(tm, tm_cap)

    # Row tile: multiple of 16 (bf16 sublane packing).  Whenever there are >= 32
    # rows, force an even number of grid steps (>= 2) so both v7x TensorCores get
    # equal work under dimension_semantics=("parallel",).
    M16 = _round_up(M, 16)
    if M16 < 32:
        n_steps = 1
        tm_eff = M16
    else:
        n_steps = max(2, _cdiv(M16, tm))
        n_steps = _round_up(n_steps, 2)
        tm_eff = _round_up(_cdiv(M16, n_steps), 16)
    M_pad = n_steps * tm_eff
    if M_pad != M:
        x2d = jnp.pad(x2d, ((0, M_pad - M), (0, 0)))

    # bf16 MXU operands (accumulation stays f32 inside the kernel).
    x2d = x2d.astype(compute_dtype)
    w1c = w1.astype(compute_dtype)
    w2c = w2.astype(compute_dtype)
    b1_2d = b1.reshape(1, H).astype(jnp.float32)
    # Fold b2 and pos_enc into a single resident (2, E_pad) block (one DMA stream).
    b2pos = jnp.stack([b2_flat, pos_flat]).astype(jnp.float32)

    # Explicit VMEM limit: at least the known-good 32 MiB, grown to the actual
    # footprint for big tiles, capped at ~3/4 of the chip's capacity.
    footprint = tm_eff * per_row + weights_bytes + slack
    vmem_limit = int(min(budget, max(32 << 20, footprint)))

    flops = 2 * M_pad * (K_pad * H + H * E_pad)
    transcendentals = M_pad * (H + E_pad)                 # one exp per SiLU element
    bytes_accessed = (M_pad * (K_pad * cd_isz + E_pad * out_isz)  # x in, out
                      + (K_pad * H + H * E_pad) * cd_isz          # weights
                      + (H + 2 * E_pad) * 4)                      # biases + pos

    out = pl.pallas_call(
        _const_model_kernel,
        out_shape=jax.ShapeDtypeStruct((M_pad, E_pad), out_dtype),
        grid_spec=pltpu.PrefetchScalarGridSpec(
            num_scalar_prefetch=0,
            grid=(n_steps,),
            in_specs=[
                pl.BlockSpec((tm_eff, K_pad), lambda i: (i, 0)),   # x rows tiled
                pl.BlockSpec((K_pad, H), lambda i: (0, 0)),        # w1 resident
                pl.BlockSpec((1, H), lambda i: (0, 0)),            # b1 resident
                pl.BlockSpec((H, E_pad), lambda i: (0, 0)),        # w2 resident
                pl.BlockSpec((2, E_pad), lambda i: (0, 0)),        # [b2; pos] resident
            ],
            out_specs=pl.BlockSpec((tm_eff, E_pad), lambda i: (i, 0)),
        ),
        compiler_params=pltpu.CompilerParams(
            dimension_semantics=("parallel",),
            vmem_limit_bytes=vmem_limit,
        ),
        cost_estimate=pl.CostEstimate(
            flops=flops,
            transcendentals=transcendentals,
            bytes_accessed=bytes_accessed,
        ),
    )(x2d, w1c, b1_2d, w2c, b2pos)

    return out[:M, :E].reshape(B, S, E)


def make_params(key, embed_size=512):
    # deterministic synthetic init (stand-in for init_weights / trunc_normal_)
    k1, k2, k3 = jax.random.split(key, 3)
    w1 = jax.random.normal(k1, (6, 128), jnp.float32) * 0.02
    b1 = jnp.zeros((128,), jnp.float32)
    w2 = jax.random.normal(k2, (128, embed_size), jnp.float32) * 0.02
    b2 = jnp.zeros((embed_size,), jnp.float32)
    pos_enc = jax.random.normal(k3, (1, 1, embed_size), jnp.float32) * 0.02
    return w1, b1, w2, b2, pos_enc


def reference_forward(x, w1, b1, w2, b2, pos_enc):
    h = jax.nn.silu(x @ w1 + b1)
    y = jax.nn.silu(h @ w2 + b2)
    return y + pos_enc


if __name__ == "__main__":
    key = jax.random.PRNGKey(0)
    kx, kp = jax.random.split(key)

    F_IN, EMBED = 6, 512
    w1, b1, w2, b2, pos_enc = make_params(kp, EMBED)

    # (B, S) cases: tiny smoke test (single step), ragged M (padding path),
    # and a multi-step case (exercises the even-step megacore grid).
    cases = [(2, 8), (3, 7), (4, 128)]
    ks = jax.random.split(kx, len(cases))
    for (B, S), k in zip(cases, ks):
        x = jax.random.normal(k, (B, S, F_IN), jnp.float32)
        out = const_model_forward(x, w1, b1, w2, b2, pos_enc)
        out = jax.block_until_ready(out)
        ref = reference_forward(x, w1, b1, w2, b2, pos_enc)
        assert out.shape == (B, S, EMBED)
        assert out.dtype == jnp.float32
        # bf16 MXU operands (f32 accumulation) -> loosened tolerance vs f32 reference.
        assert jnp.allclose(out, ref, atol=2e-3, rtol=2e-2), (
            (B, S), float(jnp.max(jnp.abs(out - ref))))

    print("KERNEL_OK")
</pallas_src>

<mosaic_0001>
module attributes {stable_mosaic.version = 11 : i64} {
  func.func @_const_model_kernel(%arg0: i32, %arg1: memref<16x8xbf16, #tpu.memory_space<vmem>>, %arg2: memref<8x128xbf16, #tpu.memory_space<vmem>>, %arg3: memref<1x128xf32, #tpu.memory_space<vmem>>, %arg4: memref<128x512xbf16, #tpu.memory_space<vmem>>, %arg5: memref<2x512xf32, #tpu.memory_space<vmem>>, %arg6: memref<16x512xf32, #tpu.memory_space<vmem>>) attributes {dimension_semantics = [#tpu.dimension_semantics<parallel>], iteration_bounds = array<i64: 1>, scalar_prefetch = 0 : i64, scratch_operands = 0 : i64, tpu.core_type = #tpu.core_type<tc>, window_params = [{transform_indices = @transform_0, window_bounds = array<i64: 16, 8>}, {pipeline_mode = #tpu.pipeline_mode<synchronous>, transform_indices = @transform_1, window_bounds = array<i64: 8, 128>}, {pipeline_mode = #tpu.pipeline_mode<synchronous>, transform_indices = @transform_2, window_bounds = array<i64: 1, 128>}, {pipeline_mode = #tpu.pipeline_mode<synchronous>, transform_indices = @transform_3, window_bounds = array<i64: 128, 512>}, {pipeline_mode = #tpu.pipeline_mode<synchronous>, transform_indices = @transform_4, window_bounds = array<i64: 2, 512>}, {transform_indices = @transform_5, window_bounds = array<i64: 16, 512>}]} {
    %c0 = arith.constant 0 : index
    %c0_0 = arith.constant 0 : index
    %0 = vector.load %arg1[%c0, %c0_0] : memref<16x8xbf16, #tpu.memory_space<vmem>>, vector<16x8xbf16>
    %c0_1 = arith.constant 0 : index
    %c0_2 = arith.constant 0 : index
    %1 = vector.load %arg2[%c0_1, %c0_2] : memref<8x128xbf16, #tpu.memory_space<vmem>>, vector<8x128xbf16>
    %cst = arith.constant dense<0.000000e+00> : vector<16x128xf32>
    %2 = tpu.matmul %0, %1, %cst {dimension_numbers = #tpu.dot_dimension_numbers<[1], [0], [0], [1], [0, 0, 1, 1], [], []>} : vector<16x8xbf16>, vector<8x128xbf16>, vector<16x128xf32> -> vector<16x128xf32>
    %c0_3 = arith.constant 0 : index
    %c0_4 = arith.constant 0 : index
    %3 = vector.load %arg3[%c0_3, %c0_4] : memref<1x128xf32, #tpu.memory_space<vmem>>, vector<1x128xf32>
    %4 = vector.broadcast %3 : vector<1x128xf32> to vector<16x128xf32>
    %5 = arith.addf %2, %4 : vector<16x128xf32>
    %cst_5 = arith.constant 0.000000e+00 : f32
    %6 = vector.broadcast %cst_5 : f32 to vector<16x128xf32>
    %7 = arith.subf %6, %5 : vector<16x128xf32>
    %8 = math.exp %7 : vector<16x128xf32>
    %cst_6 = arith.constant 1.000000e+00 : f32
    %9 = vector.broadcast %cst_6 : f32 to vector<16x128xf32>
    %10 = arith.addf %9, %8 : vector<16x128xf32>
    %11 = arith.divf %5, %10 : vector<16x128xf32>
    %12 = arith.truncf %11 : vector<16x128xf32> to vector<16x128xbf16>
    %c0_7 = arith.constant 0 : index
    %c0_8 = arith.constant 0 : index
    %13 = vector.load %arg4[%c0_7, %c0_8] : memref<128x512xbf16, #tpu.memory_space<vmem>>, vector<128x512xbf16>
    %cst_9 = arith.constant dense<0.000000e+00> : vector<16x512xf32>
    %14 = tpu.matmul %12, %13, %cst_9 {dimension_numbers = #tpu.dot_dimension_numbers<[1], [0], [0], [1], [0, 0, 1, 1], [], []>} : vector<16x128xbf16>, vector<128x512xbf16>, vector<16x512xf32> -> vector<16x512xf32>
    %c0_10 = arith.constant 0 : index
    %c0_11 = arith.constant 0 : index
    %15 = vector.load %arg5[%c0_10, %c0_11] : memref<2x512xf32, #tpu.memory_space<vmem>>, vector<1x512xf32>
    %16 = vector.broadcast %15 : vector<1x512xf32> to vector<16x512xf32>
    %17 = arith.addf %14, %16 : vector<16x512xf32>
    %cst_12 = arith.constant 0.000000e+00 : f32
    %18 = vector.broadcast %cst_12 : f32 to vector<16x512xf32>
    %19 = arith.subf %18, %17 : vector<16x512xf32>
    %20 = math.exp %19 : vector<16x512xf32>
    %cst_13 = arith.constant 1.000000e+00 : f32
    %21 = vector.broadcast %cst_13 : f32 to vector<16x512xf32>
    %22 = arith.addf %21, %20 : vector<16x512xf32>
    %23 = arith.divf %17, %22 : vector<16x512xf32>
    %c1 = arith.constant 1 : index
    %c0_14 = arith.constant 0 : index
    %24 = vector.load %arg5[%c1, %c0_14] : memref<2x512xf32, #tpu.memory_space<vmem>>, vector<1x512xf32>
    %25 = vector.broadcast %24 : vector<1x512xf32> to vector<16x512xf32>
    %26 = arith.addf %23, %25 : vector<16x512xf32>
    %c0_15 = arith.constant 0 : index
    %c0_16 = arith.constant 0 : index
    %27 = vector.load %arg6[%c0_15, %c0_16] : memref<16x512xf32, #tpu.memory_space<vmem>>, vector<16x512xf32>
    tpu.vector_store %arg6[%c0_15, %c0_16], %26 {strides = array<i32>} : memref<16x512xf32, #tpu.memory_space<vmem>>, vector<16x512xf32>,
    return
  }
  func.func @transform_0(%arg0: i32) -> (i32, i32) {
    %c0_i32 = arith.constant 0 : i32
    %c0_i32_0 = arith.constant 0 : i32
    return %arg0, %c0_i32 : i32, i32
  }
  func.func @transform_1(%arg0: i32) -> (i32, i32) {
    %c0_i32 = arith.constant 0 : i32
    %c0_i32_0 = arith.constant 0 : i32
    %c0_i32_1 = arith.constant 0 : i32
    return %c0_i32, %c0_i32_0 : i32, i32
  }
  func.func @transform_2(%arg0: i32) -> (i32, i32) {
    %c0_i32 = arith.constant 0 : i32
    %c0_i32_0 = arith.constant 0 : i32
    %c0_i32_1 = arith.constant 0 : i32
    return %c0_i32, %c0_i32_0 : i32, i32
  }
  func.func @transform_3(%arg0: i32) -> (i32, i32) {
    %c0_i32 = arith.constant 0 : i32
    %c0_i32_0 = arith.constant 0 : i32
    %c0_i32_1 = arith.constant 0 : i32
    return %c0_i32, %c0_i32_0 : i32, i32
  }
  func.func @transform_4(%arg0: i32) -> (i32, i32) {
    %c0_i32 = arith.constant 0 : i32
    %c0_i32_0 = arith.constant 0 : i32
    %c0_i32_1 = arith.constant 0 : i32
    return %c0_i32, %c0_i32_0 : i32, i32
  }
  func.func @transform_5(%arg0: i32) -> (i32, i32) {
    %c0_i32 = arith.constant 0 : i32
    %c0_i32_0 = arith.constant 0 : i32
    return %arg0, %c0_i32 : i32, i32
  }
}

</mosaic_0001>

<llo_original>
// kernel: tpu_custom_call.1
$region0: #{tpu_custom_call.1}
  #allocation0 [shape = 'u32[]', space=smem, size = 0x4, offset = 0x4, fixed_abs, tag = 'smem constant byte address 0x4 - core index']
  #allocation1 [shape = 'u32[144,128]{1,0:T(1,128)}', space=vmem, size = 0x12000, scoped, tag = 'internal scratch']
  %s0 = inlined_call_operand.vmem [shape: bf16[16,8], index: 0, kind: input, shape index: {}]
  %s1 = inlined_call_operand.vmem [shape: bf16[8,128], index: 1, kind: input, shape index: {}]
  %s2 = inlined_call_operand.vmem [shape: f32[1,128], index: 2, kind: input, shape index: {}]
  %s3 = inlined_call_operand.hbm [shape: bf16[128,512], index: 3, kind: input, shape index: {}]
  %s4 = inlined_call_operand.vmem [shape: f32[2,512], index: 4, kind: input, shape index: {}]
  %s5 = inlined_call_operand.hbm [shape: f32[16,512], index: 5, kind: output, shape index: {}]
  %s6 = sld [smem:[#allocation0]]
  $region34: #{tpu_custom_call.1} parent=0
    _
  %s8 = ssub.s32 1, %s6
  %s9 = scalar_select 0, %s8, %s6
  $region1: #{tpu_custom_call.1} parent=0
    #allocation2 [shape = 'u8[131072]{0}', space=vmem, size = 0x20000, scoped, tag = 'input window, operand 3, single buffered']
    #allocation3 [shape = 's32[1]{0}', space=sflag, size = 0x4, scoped, tag = 'scoped memory for tpu_custom_call.1']
    #allocation4 [shape = 's32[1]{0}', space=sflag, size = 0x4, scoped, tag = 'scoped memory for tpu_custom_call.1']
    #allocation5 [shape = 'u8[32768]{0}', space=vmem, size = 0x8000, scoped, tag = 'output window, operand 0, single buffered']
    %10 = vsyncpa [#allocation3], 0
    %11 = vsyncpa [#allocation4], 0
    // Predicated region
    $region2: #{tpu_custom_call.1} parent=1 // pred_check
      _
    $region3: #{tpu_custom_call.1} parent=1 // pred_check_branch
      %13 = sbr.rel (0) target = $region5
    $region4: #{tpu_custom_call.1} parent=1 // pred_region
      _
    $region5: #{tpu_custom_call.1} parent=1 // pred_fallthru
      _
    // Predicated region
    $region6: #{tpu_custom_call.1} parent=1 // pred_check
      _
    $region7: #{tpu_custom_call.1} parent=1 // pred_check_branch
      %15 = sbr.rel (0) target = $region9
    $region8: #{tpu_custom_call.1} parent=1 // pred_region
      _
    $region9: #{tpu_custom_call.1} parent=1 // pred_fallthru
      _
    // Predicated region
    $region10: #{tpu_custom_call.1} parent=1 // pred_check
      _
    $region11: #{tpu_custom_call.1} parent=1 // pred_check_branch
      %17 = sbr.rel (0) target = $region13
    $region12: #{tpu_custom_call.1} parent=1 // pred_region
      _
    $region13: #{tpu_custom_call.1} parent=1 // pred_fallthru
      _
    // Predicated region
    $region14: #{tpu_custom_call.1} parent=1 // pred_check
      _
    $region15: #{tpu_custom_call.1} parent=1 // pred_check_branch
      %19 = sbr.rel (0) target = $region17
    $region16: #{tpu_custom_call.1} parent=1 // pred_region
      %s21 = ssub.s32 4096, 4096
      %22 = vsyncadd [#allocation3], %s21
      %s23 = sshll.u32 [#allocation2], 4
      %s24 = int_to_ptr.vmem [resolvable:$true] %s23
      %29 = dma.hbm_to_vmem [thread:$0]  %s3, 4096, %s24, [#allocation3], 256, 256, 16
    $region17: #{tpu_custom_call.1} parent=1 // pred_fallthru
      _
    // Predicated region
    $region18: #{tpu_custom_call.1} parent=1 // pred_check
      _
    $region19: #{tpu_custom_call.1} parent=1 // pred_check_branch
      %31 = sbr.rel (0) target = $region21
    $region20: #{tpu_custom_call.1} parent=1 // pred_region
      _
    $region21: #{tpu_custom_call.1} parent=1 // pred_fallthru
      _
    // Predicated region
    $region22: #{tpu_custom_call.1} parent=1 // pred_check
      _
    $region23: #{tpu_custom_call.1} parent=1 // pred_check_branch
      %33 = sbr.rel (0) target = $region25
    $region24: #{tpu_custom_call.1} parent=1 // pred_region
      %34 = dma.done [#allocation3], 4096
    $region25: #{tpu_custom_call.1} parent=1 // pred_fallthru
      _
    %v36 = vld [vmem:[%s0] sm:$0xf]
    %v37 = vld [vmem:[%s0 + $0x4] sm:$0xf]
    %v38 = vld [vmem:[%s1] sm:$0xf]
    %v39 = vld [vmem:[%s2] sm:$0x1]
    %v41 = vlaneseq
    %v42 = vshrl.u32 %v41, 7
    %v43 = vsub.s32 0, %v42
    %v44 = vrot.slane %v39, %v43
    %v48 = vunpack.c.l.b16 %v36
    %v49 = vunpack.c.l.b16 %v37
    %v50 = vpack.c.b16 %v49, %v48
    %vm51 = vcmask 64512
    %v53 = vsel %vm51, %v50, 0
    %vm55 = vcmask 1043456
    %v57 = vsel %vm55, %v38, 0
    %59 = vmatprep.subr.bf16.mxu0 0
    %60 = vmatpush1.bf16.msra.mxu0 0
    %61 = vmatprep.subr.bf16.mxu0 0
    %62 = vmatpush1.bf16.msra.mxu0 0
    %63 = vmatprep.subr.bf16.mxu0 0
    %64 = vmatpush1.bf16.msra.mxu0 0
    %65 = vmatprep.subr.bf16.mxu0 0
    %66 = vmatpush1.bf16.msra.mxu0 0
    %67 = vmatprep.subr.bf16.mxu0 0
    %68 = vmatpush1.bf16.msra.mxu0 0
    %69 = vmatprep.subr.bf16.mxu0 0
    %70 = vmatpush1.bf16.msra.mxu0 0
    %71 = vmatprep.subr.bf16.mxu0 0
    %72 = vmatpush1.bf16.msra.mxu0 0
    %73 = vmatprep.subr.bf16.mxu0 0
    %74 = vmatpush1.bf16.msra.mxu0 %v57
    %75 = vmatprep.subr.bf16.mxu0 0
    %76 = vmatpush2.bf16.msra.mxu0 0
    %77 = vmatprep.subr.bf16.mxu0 0
    %78 = vmatpush2.bf16.msra.mxu0 0
    %79 = vmatprep.subr.bf16.mxu0 0
    %80 = vmatpush2.bf16.msra.mxu0 0
    %81 = vmatprep.subr.bf16.mxu0 0
    %82 = vmatpush2.bf16.msra.mxu0 0
    %83 = vmatprep.subr.bf16.mxu0 0
    %84 = vmatpush2.bf16.msra.mxu0 0
    %85 = vmatprep.subr.bf16.mxu0 0
    %86 = vmatpush2.bf16.msra.mxu0 0
    %87 = vmatprep.subr.bf16.mxu0 0
    %88 = vmatpush2.bf16.msra.mxu0 0
    %89 = vmatprep.subr.bf16.mxu0 0
    %90 = vmatpush2.bf16.msra.mxu0 0
    %91 = vmatprep.mubr.bf16.mxu0 0
    %92 = vmatmul.mubr.bf16.gmra.mxu0 %v53
    %v93 = vpop.f32.mrf.mxu0
    %v94 = vadd.f32 %v44, %v93
    %v95 = vpop.f32.mrf.mxu0
    %v96 = vpop.f32.mrf.mxu0
    %v97 = vadd.f32 %v44, %v96
    %v98 = vpop.f32.mrf.mxu0
    %99 = vdwg.mxu0
    %v100 = vsub.f32 0.0, %v94
    %v101 = vsub.f32 0.0, %v97
    %v102 = vmul.f32 %v100, 1.442695
    %v103 = vpow.pop %v102
    %v104 = vmul.f32 %v101, 1.442695
    %v105 = vpow.pop %v104
    %v106 = vadd.f32 %v103, 1.0
    %v107 = vadd.f32 %v105, 1.0
    %v108 = vrcp.pop %v106
    %v109 = vmul.f32 %v94, %v108
    %v110 = vrcp.pop %v107
    %v111 = vmul.f32 %v97, %v110
    %v112 = vpack.c.bf16 %v111, %v109
    %v113 = vld [vmem:[#allocation2] sm:$0xff]
    %v114 = vld [vmem:[#allocation2 + $0x8] sm:$0xff]
    %v115 = vld [vmem:[#allocation2 + $0x10] sm:$0xff]
    %v116 = vld [vmem:[#allocation2 + $0x18] sm:$0xff]
    %v117 = vld [vmem:[#allocation2 + $0x20] sm:$0xff]
    %v118 = vld [vmem:[#allocation2 + $0x28] sm:$0xff]
    %v119 = vld [vmem:[#allocation2 + $0x30] sm:$0xff]
    %v120 = vld [vmem:[#allocation2 + $0x38] sm:$0xff]
    %v121 = vld [vmem:[#allocation2 + $0x40] sm:$0xff]
    %v122 = vld [vmem:[#allocation2 + $0x48] sm:$0xff]
    %v123 = vld [vmem:[#allocation2 + $0x50] sm:$0xff]
    %v124 = vld [vmem:[#allocation2 + $0x58] sm:$0xff]
    %v125 = vld [vmem:[#allocation2 + $0x60] sm:$0xff]
    %v126 = vld [vmem:[#allocation2 + $0x68] sm:$0xff]
    %v127 = vld [vmem:[#allocation2 + $0x70] sm:$0xff]
    %v128 = vld [vmem:[#allocation2 + $0x78] sm:$0xff]
    %v129 = vld [vmem:[#allocation2 + $0x80] sm:$0xff]
    %v130 = vld [vmem:[#allocation2 + $0x88] sm:$0xff]
    %v131 = vld [vmem:[#allocation2 + $0x90] sm:$0xff]
    %v132 = vld [vmem:[#allocation2 + $0x98] sm:$0xff]
    %v133 = vld [vmem:[#allocation2 + $0xa0] sm:$0xff]
    %v134 = vld [vmem:[#allocation2 + $0xa8] sm:$0xff]
    %v135 = vld [vmem:[#allocation2 + $0xb0] sm:$0xff]
    %v136 = vld [vmem:[#allocation2 + $0xb8] sm:$0xff]
    %v137 = vld [vmem:[#allocation2 + $0xc0] sm:$0xff]
    %v138 = vld [vmem:[#allocation2 + $0xc8] sm:$0xff]
    %v139 = vld [vmem:[#allocation2 + $0xd0] sm:$0xff]
    %v140 = vld [vmem:[#allocation2 + $0xd8] sm:$0xff]
    %v141 = vld [vmem:[#allocation2 + $0xe0] sm:$0xff]
    %v142 = vld [vmem:[#allocation2 + $0xe8] sm:$0xff]
    %v143 = vld [vmem:[#allocation2 + $0xf0] sm:$0xff]
    %v144 = vld [vmem:[#allocation2 + $0xf8] sm:$0xff]
    %v145 = vld [vmem:[%s4] ss:$2 sm:$0xf]
    %v147 = vlaneseq
    %v148 = vshrl.u32 %v147, 7
    %v149 = vsub.s32 0, %v148
    %v150 = vrot.slane %v145, %v149
    %v151 = vlaneseq
    %v152 = vshrl.u32 %v151, 7
    %v153 = vsub.s32 1, %v152
    %v154 = vrot.slane %v145, %v153
    %v155 = vlaneseq
    %v156 = vshrl.u32 %v155, 7
    %v157 = vsub.s32 2, %v156
    %v158 = vrot.slane %v145, %v157
    %v159 = vlaneseq
    %v160 = vshrl.u32 %v159, 7
    %v161 = vsub.s32 3, %v160
    %v162 = vrot.slane %v145, %v161
    %v199 = vunpack.c.l.b16 %v113
    %v200 = vunpack.c.h.b16 %v113
    %v201 = vunpack.c.l.b16 %v114
    %v202 = vunpack.c.h.b16 %v114
    %v203 = vunpack.c.l.b16 %v115
    %v204 = vunpack.c.h.b16 %v115
    %v205 = vunpack.c.l.b16 %v116
    %v206 = vunpack.c.h.b16 %v116
    %v207 = vunpack.c.l.b16 %v117
    %v208 = vunpack.c.h.b16 %v117
    %v209 = vunpack.c.l.b16 %v118
    %v210 = vunpack.c.h.b16 %v118
    %v211 = vunpack.c.l.b16 %v119
    %v212 = vunpack.c.h.b16 %v119
    %v213 = vunpack.c.l.b16 %v120
    %v214 = vunpack.c.h.b16 %v120
    %v215 = vunpack.c.l.b16 %v121
    %v216 = vunpack.c.h.b16 %v121
    %v217 = vunpack.c.l.b16 %v122
    %v218 = vunpack.c.h.b16 %v122
    %v219 = vunpack.c.l.b16 %v123
    %v220 = vunpack.c.h.b16 %v123
    %v221 = vunpack.c.l.b16 %v124
    %v222 = vunpack.c.h.b16 %v124
    %v223 = vunpack.c.l.b16 %v125
    %v224 = vunpack.c.h.b16 %v125
    %v225 = vunpack.c.l.b16 %v126
    %v226 = vunpack.c.h.b16 %v126
    %v227 = vunpack.c.l.b16 %v127
    %v228 = vunpack.c.h.b16 %v127
    %v229 = vunpack.c.l.b16 %v128
    %v230 = vunpack.c.h.b16 %v128
    %v231 = vunpack.c.l.b16 %v129
    %v232 = vunpack.c.h.b16 %v129
    %v233 = vunpack.c.l.b16 %v130
    %v234 = vunpack.c.h.b16 %v130
    %v235 = vunpack.c.l.b16 %v131
    %v236 = vunpack.c.h.b16 %v131
    %v237 = vunpack.c.l.b16 %v132
    %v238 = vunpack.c.h.b16 %v132
    %v239 = vunpack.c.l.b16 %v133
    %v240 = vunpack.c.h.b16 %v133
    %v241 = vunpack.c.l.b16 %v134
    %v242 = vunpack.c.h.b16 %v134
    %v243 = vunpack.c.l.b16 %v135
    %v244 = vunpack.c.h.b16 %v135
    %v245 = vunpack.c.l.b16 %v136
    %v246 = vunpack.c.h.b16 %v136
    %v247 = vunpack.c.l.b16 %v137
    %v248 = vunpack.c.h.b16 %v137
    %v249 = vunpack.c.l.b16 %v138
    %v250 = vunpack.c.h.b16 %v138
    %v251 = vunpack.c.l.b16 %v139
    %v252 = vunpack.c.h.b16 %v139
    %v253 = vunpack.c.l.b16 %v140
    %v254 = vunpack.c.h.b16 %v140
    %v255 = vunpack.c.l.b16 %v141
    %v256 = vunpack.c.h.b16 %v141
    %v257 = vunpack.c.l.b16 %v142
    %v258 = vunpack.c.h.b16 %v142
    %v259 = vunpack.c.l.b16 %v143
    %v260 = vunpack.c.h.b16 %v143
    %v261 = vunpack.c.l.b16 %v144
    %v262 = vunpack.c.h.b16 %v144
    %v263 = vpack.c.b16 %v203, %v199
    %v264 = vpack.c.b16 %v204, %v200
    %v265 = vpack.c.b16 %v205, %v201
    %v266 = vpack.c.b16 %v206, %v202
    %v267 = vpack.c.b16 %v211, %v207
    %v268 = vpack.c.b16 %v212, %v208
    %v269 = vpack.c.b16 %v213, %v209
    %v270 = vpack.c.b16 %v214, %v210
    %v271 = vpack.c.b16 %v219, %v215
    %v272 = vpack.c.b16 %v220, %v216
    %v273 = vpack.c.b16 %v221, %v217
    %v274 = vpack.c.b16 %v222, %v218
    %v275 = vpack.c.b16 %v227, %v223
    %v276 = vpack.c.b16 %v228, %v224
    %v277 = vpack.c.b16 %v229, %v225
    %v278 = vpack.c.b16 %v230, %v226
    %v279 = vpack.c.b16 %v235, %v231
    %v280 = vpack.c.b16 %v236, %v232
    %v281 = vpack.c.b16 %v237, %v233
    %v282 = vpack.c.b16 %v238, %v234
    %v283 = vpack.c.b16 %v243, %v239
    %v284 = vpack.c.b16 %v244, %v240
    %v285 = vpack.c.b16 %v245, %v241
    %v286 = vpack.c.b16 %v246, %v242
    %v287 = vpack.c.b16 %v251, %v247
    %v288 = vpack.c.b16 %v252, %v248
    %v289 = vpack.c.b16 %v253, %v249
    %v290 = vpack.c.b16 %v254, %v250
    %v291 = vpack.c.b16 %v259, %v255
    %v292 = vpack.c.b16 %v260, %v256
    %v293 = vpack.c.b16 %v261, %v257
    %v294 = vpack.c.b16 %v262, %v258
    %327 = vmatprep.subr.bf16.mxu0 %v292
    %328 = vmatpush1.bf16.msra.mxu0 %v291
    %329 = vmatprep.subr.bf16.mxu0 %v288
    %330 = vmatpush1.bf16.msra.mxu0 %v287
    %331 = vmatprep.subr.bf16.mxu0 %v284
    %332 = vmatpush1.bf16.msra.mxu0 %v283
    %333 = vmatprep.subr.bf16.mxu0 %v280
    %334 = vmatpush1.bf16.msra.mxu0 %v279
    %335 = vmatprep.subr.bf16.mxu0 %v276
    %336 = vmatpush1.bf16.msra.mxu0 %v275
    %337 = vmatprep.subr.bf16.mxu0 %v272
    %338 = vmatpush1.bf16.msra.mxu0 %v271
    %339 = vmatprep.subr.bf16.mxu0 %v268
    %340 = vmatpush1.bf16.msra.mxu0 %v267
    %341 = vmatprep.subr.bf16.mxu0 %v264
    %342 = vmatpush1.bf16.msra.mxu0 %v263
    %343 = vmatprep.subr.bf16.mxu0 0
    %344 = vmatpush2.bf16.msra.mxu0 0
    %345 = vmatprep.subr.bf16.mxu0 0
    %346 = vmatpush2.bf16.msra.mxu0 0
    %347 = vmatprep.subr.bf16.mxu0 0
    %348 = vmatpush2.bf16.msra.mxu0 0
    %349 = vmatprep.subr.bf16.mxu0 0
    %350 = vmatpush2.bf16.msra.mxu0 0
    %351 = vmatprep.subr.bf16.mxu0 0
    %352 = vmatpush2.bf16.msra.mxu0 0
    %353 = vmatprep.subr.bf16.mxu0 0
    %354 = vmatpush2.bf16.msra.mxu0 0
    %355 = vmatprep.subr.bf16.mxu0 0
    %356 = vmatpush2.bf16.msra.mxu0 0
    %357 = vmatprep.subr.bf16.mxu0 0
    %358 = vmatpush2.bf16.msra.mxu0 0
    %359 = vmatprep.mubr.bf16.mxu0 0
    %360 = vmatmul.mubr.bf16.gmra.mxu0 %v112
    %v361 = vpop.f32.mrf.mxu0
    %v362 = vadd.f32 %v150, %v361
    %v363 = vpop.f32.mrf.mxu0
    %v364 = vadd.f32 %v154, %v363
    %v365 = vpop.f32.mrf.mxu0
    %v366 = vadd.f32 %v150, %v365
    %v367 = vpop.f32.mrf.mxu0
    %v368 = vadd.f32 %v154, %v367
    %369 = vdwg.mxu0
    %370 = vmatprep.subr.bf16.mxu0 %v294
    %371 = vmatpush1.bf16.msra.mxu0 %v293
    %372 = vmatprep.subr.bf16.mxu0 %v290
    %373 = vmatpush1.bf16.msra.mxu0 %v289
    %374 = vmatprep.subr.bf16.mxu0 %v286
    %375 = vmatpush1.bf16.msra.mxu0 %v285
    %376 = vmatprep.subr.bf16.mxu0 %v282
    %377 = vmatpush1.bf16.msra.mxu0 %v281
    %378 = vmatprep.subr.bf16.mxu0 %v278
    %379 = vmatpush1.bf16.msra.mxu0 %v277
    %380 = vmatprep.subr.bf16.mxu0 %v274
    %381 = vmatpush1.bf16.msra.mxu0 %v273
    %382 = vmatprep.subr.bf16.mxu0 %v270
    %383 = vmatpush1.bf16.msra.mxu0 %v269
    %384 = vmatprep.subr.bf16.mxu0 %v266
    %385 = vmatpush1.bf16.msra.mxu0 %v265
    %386 = vmatprep.subr.bf16.mxu0 0
    %387 = vmatpush2.bf16.msra.mxu0 0
    %388 = vmatprep.subr.bf16.mxu0 0
    %389 = vmatpush2.bf16.msra.mxu0 0
    %390 = vmatprep.subr.bf16.mxu0 0
    %391 = vmatpush2.bf16.msra.mxu0 0
    %392 = vmatprep.subr.bf16.mxu0 0
    %393 = vmatpush2.bf16.msra.mxu0 0
    %394 = vmatprep.subr.bf16.mxu0 0
    %395 = vmatpush2.bf16.msra.mxu0 0
    %396 = vmatprep.subr.bf16.mxu0 0
    %397 = vmatpush2.bf16.msra.mxu0 0
    %398 = vmatprep.subr.bf16.mxu0 0
    %399 = vmatpush2.bf16.msra.mxu0 0
    %400 = vmatprep.subr.bf16.mxu0 0
    %401 = vmatpush2.bf16.msra.mxu0 0
    %402 = vmatprep.mubr.bf16.mxu0 0
    %403 = vmatmul.mubr.bf16.gmra.mxu0 %v112
    %v404 = vpop.f32.mrf.mxu0
    %v405 = vadd.f32 %v158, %v404
    %v406 = vpop.f32.mrf.mxu0
    %v407 = vadd.f32 %v162, %v406
    %v408 = vpop.f32.mrf.mxu0
    %v409 = vadd.f32 %v158, %v408
    %v410 = vpop.f32.mrf.mxu0
    %v411 = vadd.f32 %v162, %v410
    %412 = vdwg.mxu0
    %v413 = vsub.f32 0.0, %v362
    %v414 = vsub.f32 0.0, %v364
    %v415 = vsub.f32 0.0, %v405
    %v416 = vsub.f32 0.0, %v407
    %v417 = vsub.f32 0.0, %v366
    %v418 = vsub.f32 0.0, %v368
    %v419 = vsub.f32 0.0, %v409
    %v420 = vsub.f32 0.0, %v411
    %v421 = vmul.f32 %v413, 1.442695
    %v422 = vpow.pop %v421
    %v423 = vmul.f32 %v414, 1.442695
    %v424 = vpow.pop %v423
    %v425 = vmul.f32 %v415, 1.442695
    %v426 = vpow.pop %v425
    %v427 = vmul.f32 %v416, 1.442695
    %v428 = vpow.pop %v427
    %v429 = vmul.f32 %v417, 1.442695
    %v430 = vpow.pop %v429
    %v431 = vmul.f32 %v418, 1.442695
    %v432 = vpow.pop %v431
    %v433 = vmul.f32 %v419, 1.442695
    %v434 = vpow.pop %v433
    %v435 = vmul.f32 %v420, 1.442695
    %v436 = vpow.pop %v435
    %v437 = vadd.f32 %v422, 1.0
    %v438 = vadd.f32 %v424, 1.0
    %v439 = vadd.f32 %v426, 1.0
    %v440 = vadd.f32 %v428, 1.0
    %v441 = vadd.f32 %v430, 1.0
    %v442 = vadd.f32 %v432, 1.0
    %v443 = vadd.f32 %v434, 1.0
    %v444 = vadd.f32 %v436, 1.0
    %v445 = vrcp.pop %v437
    %v446 = vmul.f32 %v362, %v445
    %v447 = vrcp.pop %v438
    %v448 = vmul.f32 %v364, %v447
    %v449 = vrcp.pop %v439
    %v450 = vmul.f32 %v405, %v449
    %v451 = vrcp.pop %v440
    %v452 = vmul.f32 %v407, %v451
    %v453 = vrcp.pop %v441
    %v454 = vmul.f32 %v366, %v453
    %v455 = vrcp.pop %v442
    %v456 = vmul.f32 %v368, %v455
    %v457 = vrcp.pop %v443
    %v458 = vmul.f32 %v409, %v457
    %v459 = vrcp.pop %v444
    %v460 = vmul.f32 %v411, %v459
    %s461 = scalar_lea.vmem %s4, 1
    %v462 = vld [vmem:[%s461] ss:$2 sm:$0xf]
    %v464 = vlaneseq
    %v465 = vshrl.u32 %v464, 7
    %v466 = vsub.s32 0, %v465
    %v467 = vrot.slane %v462, %v466
    %v468 = vlaneseq
    %v469 = vshrl.u32 %v468, 7
    %v470 = vsub.s32 1, %v469
    %v471 = vrot.slane %v462, %v470
    %v472 = vlaneseq
    %v473 = vshrl.u32 %v472, 7
    %v474 = vsub.s32 2, %v473
    %v475 = vrot.slane %v462, %v474
    %v476 = vlaneseq
    %v477 = vshrl.u32 %v476, 7
    %v478 = vsub.s32 3, %v477
    %v479 = vrot.slane %v462, %v478
    %v484 = vadd.f32 %v446, %v467
    %v485 = vadd.f32 %v448, %v471
    %v486 = vadd.f32 %v450, %v475
    %v487 = vadd.f32 %v452, %v479
    %v488 = vadd.f32 %v454, %v467
    %v489 = vadd.f32 %v456, %v471
    %v490 = vadd.f32 %v458, %v475
    %v491 = vadd.f32 %v460, %v479
    %492 = vst [vmem:[#allocation5] sm:$0xff] %v484
    %493 = vst [vmem:[#allocation5 + $0x8] sm:$0xff] %v485
    %494 = vst [vmem:[#allocation5 + $0x10] sm:$0xff] %v486
    %495 = vst [vmem:[#allocation5 + $0x18] sm:$0xff] %v487
    %496 = vst [vmem:[#allocation5 + $0x20] sm:$0xff] %v488
    %497 = vst [vmem:[#allocation5 + $0x28] sm:$0xff] %v489
    %498 = vst [vmem:[#allocation5 + $0x30] sm:$0xff] %v490
    %499 = vst [vmem:[#allocation5 + $0x38] sm:$0xff] %v491
    // Predicated region
    $region26: #{tpu_custom_call.1} parent=1 // pred_check
      _
    $region27: #{tpu_custom_call.1} parent=1 // pred_check_branch
      %501 = sbr.rel (0) target = $region29
    $region28: #{tpu_custom_call.1} parent=1 // pred_region
      %s503 = ssub.s32 1024, 1024
      %504 = vsyncadd [#allocation4], %s503
      %s505 = sshll.u32 [#allocation5], 4
      %s506 = int_to_ptr.vmem [resolvable:$true] %s505
      %511 = dma.vmem_to_hbm [thread:$0]  %s506, 1024, %s5, [#allocation4], 512, 512, 32
    $region29: #{tpu_custom_call.1} parent=1 // pred_fallthru
      _
    // Predicated region
    $region30: #{tpu_custom_call.1} parent=1 // pred_check
      _
    $region31: #{tpu_custom_call.1} parent=1 // pred_check_branch
      %513 = sbr.rel (0) target = $region33
    $region32: #{tpu_custom_call.1} parent=1 // pred_region
      %514 = dma.done [#allocation4], 1024
    $region33: #{tpu_custom_call.1} parent=1 // pred_fallthru
      _
    %515 = vsyncpa [#allocation3], 1
    %516 = vsyncpa [#allocation4], 1

</llo_original>
